<compile_context>
chip_gen: v5e
topology: v5e:2x2
jax: 0.10.0
libtpu: 0.0.40
codegen_flags: <defaults>
</compile_context>

<pallas_src>
import jax
import jax.numpy as jnp
from jax.experimental import pallas as pl
from jax.experimental.pallas import tpu as pltpu

LANE = 128  # TPU lane width — hidden dim padded to this for lane-dense vregs.


# --------------------------------- kernel -----------------------------------

def relation_kernel(x_ref, w1_ref, b1_ref, w2_ref, b2_ref, o_ref):
    # x:  (TILE_B, D_in) f32/bf16   w1: (D_in, H_pad) bf16   b1: (1, H_pad) f32
    # w2: (H_pad, D_in)  bf16       b2: (1, D_in)     f32    o:  (TILE_B, D_in) f32
    x = x_ref[...]
    if x.dtype != jnp.bfloat16:          # static (trace-time) branch
        x = x.astype(jnp.bfloat16)

    # First linear: bf16 MXU matmul, f32 accumulate; bias + ReLU in f32 (VPU).
    h = jnp.dot(x, w1_ref[...], preferred_element_type=jnp.float32)
    h = jnp.maximum(h + b1_ref[...], 0.0)

    # Second linear: bf16 MXU matmul, f32 accumulate; bias in f32.
    y = jnp.dot(h.astype(jnp.bfloat16), w2_ref[...],
                preferred_element_type=jnp.float32) + b2_ref[...]

    # True-width (TILE_B, D_in) store: masked vst, but 4x fewer HBM bytes than
    # a 128-lane-padded output and no wrapper slice pass.
    o_ref[...] = y.astype(o_ref.dtype)


# --------------------------- parameter preparation --------------------------

def prepare_relation_params(w1, b1, w2, b2):
    """One-time parameter prep (NOT on the per-call hot path).

    PyTorch Linear layouts in:
      w1: (H, D_in), b1: (H,), w2: (D_in, H), b2: (D_in,)
    Out: transposed to (in, out); hidden dim zero-padded to 128; weights bf16.
    NOTE: the kernel is mixed-precision (bf16 MXU inputs, f32 accumulation) —
    callers needing strict f32 Linear parity should be aware.
    """
    H, D_in = w1.shape
    H_pad = -(-H // LANE) * LANE

    w1p = jnp.zeros((D_in, H_pad), jnp.float32).at[:, :H].set(w1.T)
    b1p = jnp.zeros((1, H_pad), jnp.float32).at[0, :H].set(b1)
    w2p = jnp.zeros((H_pad, D_in), jnp.float32).at[:H, :].set(w2.T)
    b2p = b2.reshape(1, D_in).astype(jnp.float32)

    return (w1p.astype(jnp.bfloat16), b1p, w2p.astype(jnp.bfloat16), b2p)


# --------------------------------- wrapper -----------------------------------

def _auto_tile_b(B):
    """Pick a batch tile: few, large steps; even step count so v7x's 2 TCs
    both get work on small/medium batches; single step for tiny batches."""
    b8 = -(-B // 8) * 8                      # sublane-rounded batch
    if b8 >= 4096:
        return 2048                          # a handful of big pipelined steps
    if b8 >= 256:
        return -(-(b8 // 2) // 8) * 8        # exactly 2 steps (one per v7x TC)
    return b8 if B >= 8 else B               # single step


def relation_module(x, params, *, tile_b=None):
    """Pallas forward pass of RelationModule.

    Args:
      x:      (B, D_in) float32 (or bfloat16 — accepted without a wrapper cast)
      params: output of prepare_relation_params()
    Returns:
      (B, D_in) float32
    """
    w1p, b1p, w2p, b2p = params
    B, D_in = x.shape
    H_pad = w1p.shape[1]
    assert w1p.shape[0] == D_in and w2p.shape == (H_pad, D_in)

    if tile_b is None:
        tile_b = _auto_tile_b(B)
    n_tiles = pl.cdiv(B, tile_b)             # partial last block is fine:
                                             # Pallas masks OOB rows on store.

    cost = pl.CostEstimate(
        flops=2 * B * H_pad * (D_in + D_in),
        transcendentals=0,
        bytes_accessed=(x.size * x.dtype.itemsize
                        + w1p.size * 2 + w2p.size * 2
                        + b1p.size * 4 + b2p.size * 4
                        + B * D_in * 4),
    )

    return pl.pallas_call(
        relation_kernel,
        out_shape=jax.ShapeDtypeStruct((B, D_in), jnp.float32),
        grid=(n_tiles,),
        in_specs=[
            pl.BlockSpec((tile_b, D_in), lambda i: (i, 0)),   # x: streamed/pipelined
            pl.BlockSpec((D_in, H_pad), lambda i: (0, 0)),    # w1: VMEM-resident
            pl.BlockSpec((1, H_pad), lambda i: (0, 0)),       # b1: resident
            pl.BlockSpec((H_pad, D_in), lambda i: (0, 0)),    # w2: resident
            pl.BlockSpec((1, D_in), lambda i: (0, 0)),        # b2: resident
        ],
        out_specs=pl.BlockSpec((tile_b, D_in), lambda i: (i, 0)),
        compiler_params=pltpu.CompilerParams(
            dimension_semantics=("parallel",)),               # megacore on v7x
        cost_estimate=cost,
    )(x, w1p, b1p, w2p, b2p)


# ----------------------------- references -----------------------------------

def relation_module_ref_f32(x, w1, b1, w2, b2):
    """Pure-f32 JAX reference matching PyTorch semantics exactly."""
    h = jnp.maximum(x @ w1.T + b1, 0.0)
    return h @ w2.T + b2


def relation_module_ref_bf16(x, w1, b1, w2, b2):
    """Reference with the same bf16-input / f32-accumulate math as the kernel."""
    h = jnp.dot(x.astype(jnp.bfloat16), w1.T.astype(jnp.bfloat16),
                preferred_element_type=jnp.float32) + b1
    h = jnp.maximum(h, 0.0)
    return jnp.dot(h.astype(jnp.bfloat16), w2.T.astype(jnp.bfloat16),
                   preferred_element_type=jnp.float32) + b2


# ----------------------------------- main ------------------------------------

if __name__ == "__main__":
    # Shapes consistent with the module: input_size=32, hidden_size=64,
    # batch = 256 "object pairs" (auto-tiled into 2 grid steps of 128 rows).
    B, D_IN, HID = 256, 32, 64

    key = jax.random.PRNGKey(0)
    kx, k1, k2, k3, k4 = jax.random.split(key, 5)

    x = jax.random.normal(kx, (B, D_IN), dtype=jnp.float32)

    # Deterministic PyTorch-Linear-style uniform init.
    bound1 = 1.0 / jnp.sqrt(D_IN)
    bound2 = 1.0 / jnp.sqrt(HID)
    w1 = jax.random.uniform(k1, (HID, D_IN), jnp.float32, -bound1, bound1)
    b1 = jax.random.uniform(k2, (HID,), jnp.float32, -bound1, bound1)
    w2 = jax.random.uniform(k3, (D_IN, HID), jnp.float32, -bound2, bound2)
    b2 = jax.random.uniform(k4, (D_IN,), jnp.float32, -bound2, bound2)

    # One-time parameter prep (transpose + pad + bf16 cast).
    params = prepare_relation_params(w1, b1, w2, b2)

    fwd = jax.jit(lambda xx: relation_module(xx, params))
    out = jax.block_until_ready(fwd(x))
    assert out.shape == (B, D_IN)

    # Exact-math check vs a reference using identical bf16/f32 mixed precision.
    ref_bf16 = relation_module_ref_bf16(x, w1, b1, w2, b2)
    assert jnp.allclose(out, ref_bf16, atol=1e-4, rtol=1e-4), \
        "mismatch vs bf16-math reference"

    # Sanity check vs the pure-f32 PyTorch-equivalent reference (bf16 MXU
    # inputs introduce small, bounded rounding differences).
    ref_f32 = relation_module_ref_f32(x, w1, b1, w2, b2)
    assert jnp.allclose(out, ref_f32, atol=1e-1, rtol=1e-1), \
        "mismatch vs f32 reference"

    # Ragged-batch path (no hot-path jnp.pad): force a partial last grid block
    # (rows 200..255 out of bounds) — Pallas masks those stores automatically.
    B2 = 200
    x2 = x[:B2]
    out2 = jax.block_until_ready(
        jax.jit(lambda xx: relation_module(xx, params, tile_b=128))(x2))
    assert out2.shape == (B2, D_IN)
    assert jnp.allclose(out2, relation_module_ref_bf16(x2, w1, b1, w2, b2),
                        atol=1e-4, rtol=1e-4), "mismatch on ragged batch"

    print("KERNEL_OK")
</pallas_src>

<mosaic_0001>
module attributes {stable_mosaic.version = 11 : i64} {
  func.func @relation_kernel(%arg0: i32, %arg1: memref<128x32xf32, #tpu.memory_space<vmem>>, %arg2: memref<32x128xbf16, #tpu.memory_space<vmem>>, %arg3: memref<1x128xf32, #tpu.memory_space<vmem>>, %arg4: memref<128x32xbf16, #tpu.memory_space<vmem>>, %arg5: memref<1x32xf32, #tpu.memory_space<vmem>>, %arg6: memref<128x32xf32, #tpu.memory_space<vmem>>) attributes {dimension_semantics = [#tpu.dimension_semantics<parallel>], iteration_bounds = array<i64: 2>, scalar_prefetch = 0 : i64, scratch_operands = 0 : i64, tpu.core_type = #tpu.core_type<tc>, window_params = [{transform_indices = @transform_0, window_bounds = array<i64: 128, 32>}, {pipeline_mode = #tpu.pipeline_mode<synchronous>, transform_indices = @transform_1, window_bounds = array<i64: 32, 128>}, {pipeline_mode = #tpu.pipeline_mode<synchronous>, transform_indices = @transform_2, window_bounds = array<i64: 1, 128>}, {pipeline_mode = #tpu.pipeline_mode<synchronous>, transform_indices = @transform_3, window_bounds = array<i64: 128, 32>}, {pipeline_mode = #tpu.pipeline_mode<synchronous>, transform_indices = @transform_4, window_bounds = array<i64: 1, 32>}, {transform_indices = @transform_5, window_bounds = array<i64: 128, 32>}]} {
    %c0 = arith.constant 0 : index
    %c0_0 = arith.constant 0 : index
    %0 = vector.load %arg1[%c0, %c0_0] : memref<128x32xf32, #tpu.memory_space<vmem>>, vector<128x32xf32>
    %1 = arith.truncf %0 : vector<128x32xf32> to vector<128x32xbf16>
    %c0_1 = arith.constant 0 : index
    %c0_2 = arith.constant 0 : index
    %2 = vector.load %arg2[%c0_1, %c0_2] : memref<32x128xbf16, #tpu.memory_space<vmem>>, vector<32x128xbf16>
    %cst = arith.constant dense<0.000000e+00> : vector<128x128xf32>
    %3 = tpu.matmul %1, %2, %cst {dimension_numbers = #tpu.dot_dimension_numbers<[1], [0], [0], [1], [0, 0, 1, 1], [], []>} : vector<128x32xbf16>, vector<32x128xbf16>, vector<128x128xf32> -> vector<128x128xf32>
    %c0_3 = arith.constant 0 : index
    %c0_4 = arith.constant 0 : index
    %4 = vector.load %arg3[%c0_3, %c0_4] : memref<1x128xf32, #tpu.memory_space<vmem>>, vector<1x128xf32>
    %5 = vector.broadcast %4 : vector<1x128xf32> to vector<128x128xf32>
    %6 = arith.addf %3, %5 : vector<128x128xf32>
    %cst_5 = arith.constant 0.000000e+00 : f32
    %7 = vector.broadcast %cst_5 : f32 to vector<128x128xf32>
    %8 = arith.maximumf %6, %7 : vector<128x128xf32>
    %9 = arith.truncf %8 : vector<128x128xf32> to vector<128x128xbf16>
    %c0_6 = arith.constant 0 : index
    %c0_7 = arith.constant 0 : index
    %10 = vector.load %arg4[%c0_6, %c0_7] : memref<128x32xbf16, #tpu.memory_space<vmem>>, vector<128x32xbf16>
    %cst_8 = arith.constant dense<0.000000e+00> : vector<128x32xf32>
    %11 = tpu.matmul %9, %10, %cst_8 {dimension_numbers = #tpu.dot_dimension_numbers<[1], [0], [0], [1], [0, 0, 1, 1], [], []>} : vector<128x128xbf16>, vector<128x32xbf16>, vector<128x32xf32> -> vector<128x32xf32>
    %c0_9 = arith.constant 0 : index
    %c0_10 = arith.constant 0 : index
    %12 = vector.load %arg5[%c0_9, %c0_10] : memref<1x32xf32, #tpu.memory_space<vmem>>, vector<1x32xf32>
    %13 = vector.broadcast %12 : vector<1x32xf32> to vector<128x32xf32>
    %14 = arith.addf %11, %13 : vector<128x32xf32>
    %c0_11 = arith.constant 0 : index
    %c0_12 = arith.constant 0 : index
    %15 = vector.load %arg6[%c0_11, %c0_12] : memref<128x32xf32, #tpu.memory_space<vmem>>, vector<128x32xf32>
    tpu.vector_store %arg6[%c0_11, %c0_12], %14 {strides = array<i32>} : memref<128x32xf32, #tpu.memory_space<vmem>>, vector<128x32xf32>,
    return
  }
  func.func @transform_0(%arg0: i32) -> (i32, i32) {
    %c0_i32 = arith.constant 0 : i32
    %c0_i32_0 = arith.constant 0 : i32
    return %arg0, %c0_i32 : i32, i32
  }
  func.func @transform_1(%arg0: i32) -> (i32, i32) {
    %c0_i32 = arith.constant 0 : i32
    %c0_i32_0 = arith.constant 0 : i32
    %c0_i32_1 = arith.constant 0 : i32
    return %c0_i32, %c0_i32_0 : i32, i32
  }
  func.func @transform_2(%arg0: i32) -> (i32, i32) {
    %c0_i32 = arith.constant 0 : i32
    %c0_i32_0 = arith.constant 0 : i32
    %c0_i32_1 = arith.constant 0 : i32
    return %c0_i32, %c0_i32_0 : i32, i32
  }
  func.func @transform_3(%arg0: i32) -> (i32, i32) {
    %c0_i32 = arith.constant 0 : i32
    %c0_i32_0 = arith.constant 0 : i32
    %c0_i32_1 = arith.constant 0 : i32
    return %c0_i32, %c0_i32_0 : i32, i32
  }
  func.func @transform_4(%arg0: i32) -> (i32, i32) {
    %c0_i32 = arith.constant 0 : i32
    %c0_i32_0 = arith.constant 0 : i32
    %c0_i32_1 = arith.constant 0 : i32
    return %c0_i32, %c0_i32_0 : i32, i32
  }
  func.func @transform_5(%arg0: i32) -> (i32, i32) {
    %c0_i32 = arith.constant 0 : i32
    %c0_i32_0 = arith.constant 0 : i32
    return %arg0, %c0_i32 : i32, i32
  }
}

</mosaic_0001>

<llo_original>
// kernel: _lambda_.1
$region0: #{_lambda_.1}
  #allocation0 [shape = 'u32[]', space=smem, size = 0x4, offset = 0x4, fixed_abs, tag = 'smem constant byte address 0x4 - core index']
  #allocation1 [shape = 'u32[72,128]{1,0:T(1,128)}', space=vmem, size = 0x9000, scoped, tag = 'internal scratch']
  %s0 = inlined_call_operand.vmem [shape: f32[256,32], index: 0, kind: input, shape index: {}]
  %s1 = inlined_call_operand.vmem [shape: bf16[32,128], index: 1, kind: input, shape index: {}]
  %s2 = inlined_call_operand.vmem [shape: f32[1,128], index: 2, kind: input, shape index: {}]
  %s3 = inlined_call_operand.vmem [shape: bf16[128,32], index: 3, kind: input, shape index: {}]
  %s4 = inlined_call_operand.vmem [shape: f32[1,32], index: 4, kind: input, shape index: {}]
  %s5 = inlined_call_operand.vmem [shape: f32[256,32], index: 5, kind: output, shape index: {}]
  %s6 = sld [smem:[#allocation0]]
  $region53: #{_lambda_.1} parent=0
    _
  %s8 = ssub.s32 1, %s6
  %s9 = scalar_select 0, %s8, %s6
  loop: start=0, step=1, limit=4
  $region2: #{_lambda_.1} parent=0 // loop_pre_header
    _
  $region3: #{_lambda_.1} parent=0 // loop_header
    %s11 = sphi 0, %s15
    %p12 = scmp.ge.s32.totalorder %s11, 4
    %s21 = sphi 0, %s23
    %s24 = sphi 0, %s21
    %s25 = sphi 0, %s24
    %s41 = sphi 0, %s25
    %s45 = sphi 0, %s45
    %s47 = sphi 0, %s45
    %s48 = sphi 0, %s47
    %s62 = sphi 0, %s48
    %s66 = sphi 0, %s66
    %s68 = sphi 0, %s66
    %s69 = sphi 0, %s68
    %s83 = sphi 0, %s69
    %s87 = sphi 0, %s87
    %s89 = sphi 0, %s87
    %s90 = sphi 0, %s89
    %s104 = sphi 0, %s90
    %s108 = sphi 0, %s108
    %s110 = sphi 0, %s108
    %s111 = sphi 0, %s110
    %s125 = sphi 0, %s111
    %s131 = sphi 0, %s133
    %s134 = sphi 0, %s131
    %s135 = sphi 0, %s134
    %s151 = sphi 0, %s135
  $region4: #{_lambda_.1} parent=0 // loop_header_branch
    %14 = sbr.rel (%p12) target = $region8
  $region5: #{_lambda_.1} parent=0 // loop_body
    %s16 = ssub.s32 %s11, 1
    %s17 = ssub.s32 %s11, 2
    %s18 = sadd.s32 %s11, 1
    %s19 = ssub.s32 %s11, %s18
    %p20 = scmp.eq.s32.totalorder %s19, 0
    %s22 = sadd.s32 %s21, 1
    %s23 = scalar_select %p20, %s21, %s22
    %p26 = pneg %p20
    %p27 = scmp.eq.s32.totalorder %s11, 1
    %p28 = por %p26, %p27
    %p29 = scmp.ne.s32.totalorder %s21, %s24
    %p30 = scmp.eq.s32.totalorder %s11, 0
    %p31 = por %p29, %p30
    %p32 = scmp.ne.s32.totalorder %s21, %s24
    %p33 = scmp.eq.s32.totalorder %s16, 1
    %p34 = por %p32, %p33
    %p35 = scmp.ne.s32.totalorder %s24, %s25
    %p36 = scmp.eq.s32.totalorder %s16, 0
    %p37 = por %p35, %p36
    %p38 = scmp.ne.s32.totalorder %s24, %s25
    %p39 = scmp.eq.s32.totalorder %s17, 1
    %p40 = por %p38, %p39
    %p42 = scmp.ne.s32.totalorder %s25, %s41
    %p43 = scmp.eq.s32.totalorder %s17, 0
    %p44 = por %p42, %p43
    %s46 = sadd.s32 %s45, 1
    %p49 = scmp.eq.s32.totalorder %s11, 1
    %p50 = scmp.ne.s32.totalorder %s45, %s47
    %p51 = scmp.eq.s32.totalorder %s11, 0
    %p52 = por %p50, %p51
    %p53 = scmp.ne.s32.totalorder %s45, %s47
    %p54 = scmp.eq.s32.totalorder %s16, 1
    %p55 = por %p53, %p54
    %p56 = scmp.ne.s32.totalorder %s47, %s48
    %p57 = scmp.eq.s32.totalorder %s16, 0
    %p58 = por %p56, %p57
    %p59 = scmp.ne.s32.totalorder %s47, %s48
    %p60 = scmp.eq.s32.totalorder %s17, 1
    %p61 = por %p59, %p60
    %p63 = scmp.ne.s32.totalorder %s48, %s62
    %p64 = scmp.eq.s32.totalorder %s17, 0
    %p65 = por %p63, %p64
    %s67 = sadd.s32 %s66, 1
    %p70 = scmp.eq.s32.totalorder %s11, 1
    %p71 = scmp.ne.s32.totalorder %s66, %s68
    %p72 = scmp.eq.s32.totalorder %s11, 0
    %p73 = por %p71, %p72
    %p74 = scmp.ne.s32.totalorder %s66, %s68
    %p75 = scmp.eq.s32.totalorder %s16, 1
    %p76 = por %p74, %p75
    %p77 = scmp.ne.s32.totalorder %s68, %s69
    %p78 = scmp.eq.s32.totalorder %s16, 0
    %p79 = por %p77, %p78
    %p80 = scmp.ne.s32.totalorder %s68, %s69
    %p81 = scmp.eq.s32.totalorder %s17, 1
    %p82 = por %p80, %p81
    %p84 = scmp.ne.s32.totalorder %s69, %s83
    %p85 = scmp.eq.s32.totalorder %s17, 0
    %p86 = por %p84, %p85
    %s88 = sadd.s32 %s87, 1
    %p91 = scmp.eq.s32.totalorder %s11, 1
    %p92 = scmp.ne.s32.totalorder %s87, %s89
    %p93 = scmp.eq.s32.totalorder %s11, 0
    %p94 = por %p92, %p93
    %p95 = scmp.ne.s32.totalorder %s87, %s89
    %p96 = scmp.eq.s32.totalorder %s16, 1
    %p97 = por %p95, %p96
    %p98 = scmp.ne.s32.totalorder %s89, %s90
    %p99 = scmp.eq.s32.totalorder %s16, 0
    %p100 = por %p98, %p99
    %p101 = scmp.ne.s32.totalorder %s89, %s90
    %p102 = scmp.eq.s32.totalorder %s17, 1
    %p103 = por %p101, %p102
    %p105 = scmp.ne.s32.totalorder %s90, %s104
    %p106 = scmp.eq.s32.totalorder %s17, 0
    %p107 = por %p105, %p106
    %s109 = sadd.s32 %s108, 1
    %p112 = scmp.eq.s32.totalorder %s11, 1
    %p113 = scmp.ne.s32.totalorder %s108, %s110
    %p114 = scmp.eq.s32.totalorder %s11, 0
    %p115 = por %p113, %p114
    %p116 = scmp.ne.s32.totalorder %s108, %s110
    %p117 = scmp.eq.s32.totalorder %s16, 1
    %p118 = por %p116, %p117
    %p119 = scmp.ne.s32.totalorder %s110, %s111
    %p120 = scmp.eq.s32.totalorder %s16, 0
    %p121 = por %p119, %p120
    %p122 = scmp.ne.s32.totalorder %s110, %s111
    %p123 = scmp.eq.s32.totalorder %s17, 1
    %p124 = por %p122, %p123
    %p126 = scmp.ne.s32.totalorder %s111, %s125
    %p127 = scmp.eq.s32.totalorder %s17, 0
    %p128 = por %p126, %p127
    %s129 = ssub.s32 %s11, %s18
    %p130 = scmp.eq.s32.totalorder %s129, 0
    %s132 = sadd.s32 %s131, 1
    %s133 = scalar_select %p130, %s131, %s132
    %p136 = pneg %p130
    %p137 = scmp.eq.s32.totalorder %s11, 1
    %p138 = por %p136, %p137
    %p139 = scmp.ne.s32.totalorder %s131, %s134
    %p140 = scmp.eq.s32.totalorder %s11, 0
    %p141 = por %p139, %p140
    %p142 = scmp.ne.s32.totalorder %s131, %s134
    %p143 = scmp.eq.s32.totalorder %s16, 1
    %p144 = por %p142, %p143
    %p145 = scmp.ne.s32.totalorder %s134, %s135
    %p146 = scmp.eq.s32.totalorder %s16, 0
    %p147 = por %p145, %p146
    %p148 = scmp.ne.s32.totalorder %s134, %s135
    %p149 = scmp.eq.s32.totalorder %s17, 1
    %p150 = por %p148, %p149
    %p152 = scmp.ne.s32.totalorder %s135, %s151
    %p153 = scmp.eq.s32.totalorder %s17, 0
    %p154 = por %p152, %p153
    %p155 = scmp.le.s32.totalorder 1, %s11
    %p156 = scmp.lt.s32.totalorder %s11, 3
    %p157 = pnand %p155, %p156
    %p158 = pneg %p157
    // Predicated region
    $region9: #{_lambda_.1} parent=5 // pred_check
      _
    $region10: #{_lambda_.1} parent=5 // pred_check_branch
      %160 = sbr.rel (%p157) target = $region12
    $region11: #{_lambda_.1} parent=5 // pred_region
      %s161 = ssub.s32 %s11, 1
      // Predicated region
      $region13: #{_lambda_.1} parent=11 // pred_check
        %p162 = pneg %p58
      $region14: #{_lambda_.1} parent=11 // pred_check_branch
        %164 = sbr.rel (%p162) target = $region16
      $region15: #{_lambda_.1} parent=11 // pred_region
        _
      $region16: #{_lambda_.1} parent=11 // pred_fallthru
        _
      // Predicated region
      $region17: #{_lambda_.1} parent=11 // pred_check
        %p165 = pneg %p79
      $region18: #{_lambda_.1} parent=11 // pred_check_branch
        %167 = sbr.rel (%p165) target = $region20
      $region19: #{_lambda_.1} parent=11 // pred_region
        _
      $region20: #{_lambda_.1} parent=11 // pred_fallthru
        _
      // Predicated region
      $region21: #{_lambda_.1} parent=11 // pred_check
        %p168 = pneg %p100
      $region22: #{_lambda_.1} parent=11 // pred_check_branch
        %170 = sbr.rel (%p168) target = $region24
      $region23: #{_lambda_.1} parent=11 // pred_region
        _
      $region24: #{_lambda_.1} parent=11 // pred_fallthru
        _
      // Predicated region
      $region25: #{_lambda_.1} parent=11 // pred_check
        %p171 = pneg %p121
      $region26: #{_lambda_.1} parent=11 // pred_check_branch
        %173 = sbr.rel (%p171) target = $region28
      $region27: #{_lambda_.1} parent=11 // pred_region
        _
      $region28: #{_lambda_.1} parent=11 // pred_fallthru
        _
    $region12: #{_lambda_.1} parent=5 // pred_fallthru
      _
    %p174 = scmp.lt.s32.totalorder %s11, 2
    // Predicated region
    $region29: #{_lambda_.1} parent=5 // pred_check
      %p175 = pneg %p174
    $region30: #{_lambda_.1} parent=5 // pred_check_branch
      %177 = sbr.rel (%p175) target = $region32
    $region31: #{_lambda_.1} parent=5 // pred_region
      // Predicated region
      $region33: #{_lambda_.1} parent=31 // pred_check
        %p178 = pneg %p31
      $region34: #{_lambda_.1} parent=31 // pred_check_branch
        %180 = sbr.rel (%p178) target = $region36
      $region35: #{_lambda_.1} parent=31 // pred_region
        %s181 = smul.u32 16, %s11
        %p182 = scmp.lt.s32.totalorder %s181, 31
        %s183 = scalar_select %p182, %s181, 31
        %s184 = smul.addr %s183, 8
        %s185 = scalar_lea.vmem %s0, %s184
        %s186 = smul.u32 16, %s11
      $region36: #{_lambda_.1} parent=31 // pred_fallthru
        _
    $region32: #{_lambda_.1} parent=5 // pred_fallthru
      _
    %p187 = scmp.le.s32.totalorder 1, %s11
    %p188 = scmp.lt.s32.totalorder %s11, 3
    %p189 = pnand %p187, %p188
    %p190 = pneg %p189
    // Predicated region
    $region37: #{_lambda_.1} parent=5 // pred_check
      _
    $region38: #{_lambda_.1} parent=5 // pred_check_branch
      %192 = sbr.rel (%p189) target = $region40
    $region39: #{_lambda_.1} parent=5 // pred_region
      %s193 = ssub.s32 %s11, 1
      %s194 = smul.u32 16, %s16
      %p195 = scmp.lt.s32.totalorder %s194, 31
      %s196 = scalar_select %p195, %s194, 31
      %s197 = smul.addr %s196, 8
      %s198 = scalar_lea.vmem %s0, %s197
      %p199 = pneg %p37
      %p200 = pneg %p34
      %p201 = pneg %p58
      %p202 = pneg %p55
      %p203 = pneg %p79
      %p204 = pneg %p76
      %p205 = pneg %p100
      %p206 = pneg %p97
      %p207 = pneg %p121
      %p208 = pneg %p118
      %p209 = pneg %p147
      %p210 = pneg %p144
      %s211 = smul.u32 16, %s16
      %p212 = scmp.lt.s32.totalorder %s211, 31
      %s213 = scalar_select %p212, %s211, 31
      %s214 = smul.addr %s213, 8
      %s215 = scalar_lea.vmem %s5, %s214
      %s216 = smul.u32 16, %s16
      %p217 = scmp.lt.s32.totalorder %s216, 31
      %s218 = scalar_select %p217, %s216, 31
      %s219 = smul.addr %s218, 8
      %s220 = scalar_lea.vmem %s0, %s219
      %s221 = smul.u32 16, %s16
      %s222 = smul.u32 16, %s16
      %p223 = scmp.lt.s32.totalorder %s222, 31
      %s224 = scalar_select %p223, %s222, 31
      %s225 = smul.addr %s224, 8
      %s226 = scalar_lea.vmem %s5, %s225
      %s227 = smul.u32 16, %s16
      %v229 = vld [vmem:[%s220] sm:$0xff]
      %v230 = vld [vmem:[%s220 + $0x8] sm:$0xff]
      %v231 = vld [vmem:[%s220 + $0x10] sm:$0xff]
      %v232 = vld [vmem:[%s220 + $0x18] sm:$0xff]
      %v233 = vld [vmem:[%s220 + $0x20] sm:$0xff]
      %v234 = vld [vmem:[%s220 + $0x28] sm:$0xff]
      %v235 = vld [vmem:[%s220 + $0x30] sm:$0xff]
      %v236 = vld [vmem:[%s220 + $0x38] sm:$0xff]
      %v237 = vld [vmem:[%s220 + $0x40] sm:$0xff]
      %v238 = vld [vmem:[%s220 + $0x48] sm:$0xff]
      %v239 = vld [vmem:[%s220 + $0x50] sm:$0xff]
      %v240 = vld [vmem:[%s220 + $0x58] sm:$0xff]
      %v241 = vld [vmem:[%s220 + $0x60] sm:$0xff]
      %v242 = vld [vmem:[%s220 + $0x68] sm:$0xff]
      %v243 = vld [vmem:[%s220 + $0x70] sm:$0xff]
      %v244 = vld [vmem:[%s220 + $0x78] sm:$0xff]
      %v245 = vpack.c.bf16 %v230, %v229
      %v246 = vpack.c.bf16 %v232, %v231
      %v247 = vpack.c.bf16 %v234, %v233
      %v248 = vpack.c.bf16 %v236, %v235
      %v249 = vpack.c.bf16 %v238, %v237
      %v250 = vpack.c.bf16 %v240, %v239
      %v251 = vpack.c.bf16 %v242, %v241
      %v252 = vpack.c.bf16 %v244, %v243
      %v253 = vld [vmem:[%s1] sm:$0xf]
      %v254 = vld [vmem:[%s1 + $0x4] sm:$0xf]
      %v255 = vld [vmem:[%s1 + $0x8] sm:$0xf]
      %v256 = vld [vmem:[%s1 + $0xc] sm:$0xf]
      %v257 = vld [vmem:[%s2] sm:$0x1]
      %v259 = vperm.slane %v257, 0
      %v265 = vunpack.c.l.b16 %v253
      %v266 = vunpack.c.l.b16 %v254
      %v267 = vunpack.c.l.b16 %v255
      %v268 = vunpack.c.l.b16 %v256
      %v269 = vpack.c.b16 %v266, %v265
      %v270 = vpack.c.b16 %v268, %v267
      %vm273 = vcmask 261120
      %v275 = vsel %vm273, %v245, 0
      %v278 = vsel %vm273, %v246, 0
      %v281 = vsel %vm273, %v247, 0
      %v284 = vsel %vm273, %v248, 0
      %v287 = vsel %vm273, %v249, 0
      %v290 = vsel %vm273, %v250, 0
      %v293 = vsel %vm273, %v251, 0
      %v296 = vsel %vm273, %v252, 0
      %298 = vmatpush.bf16.msra.mxu0 0
      %299 = vmatpush.bf16.msra.mxu0 0
      %300 = vmatpush.bf16.msra.mxu0 0
      %301 = vmatpush.bf16.msra.mxu0 0
      %302 = vmatpush.bf16.msra.mxu0 0
      %303 = vmatpush.bf16.msra.mxu0 0
      %304 = vmatpush.bf16.msra.mxu0 %v270
      %305 = vmatpush.bf16.msra.mxu0 %v269
      %306 = vmatmul.bf16.gmra.mxu0 %v275
      %v307 = vpop.f32.mrf.mxu0
      %v308 = vadd.f32 %v259, %v307
      %v309 = vpop.f32.mrf.mxu0
      %v310 = vadd.f32 %v259, %v309
      %311 = vmatmul.bf16.gmra.mxu0 %v278
      %v312 = vpop.f32.mrf.mxu0
      %v313 = vadd.f32 %v259, %v312
      %v314 = vpop.f32.mrf.mxu0
      %v315 = vadd.f32 %v259, %v314
      %316 = vmatmul.bf16.gmra.mxu0 %v281
      %v317 = vpop.f32.mrf.mxu0
      %v318 = vadd.f32 %v259, %v317
      %v319 = vpop.f32.mrf.mxu0
      %v320 = vadd.f32 %v259, %v319
      %321 = vmatmul.bf16.gmra.mxu0 %v284
      %v322 = vpop.f32.mrf.mxu0
      %v323 = vadd.f32 %v259, %v322
      %v324 = vpop.f32.mrf.mxu0
      %v325 = vadd.f32 %v259, %v324
      %326 = vmatmul.bf16.gmra.mxu0 %v287
      %v327 = vpop.f32.mrf.mxu0
      %v328 = vadd.f32 %v259, %v327
      %v329 = vpop.f32.mrf.mxu0
      %v330 = vadd.f32 %v259, %v329
      %331 = vmatmul.bf16.gmra.mxu0 %v290
      %v332 = vpop.f32.mrf.mxu0
      %v333 = vadd.f32 %v259, %v332
      %v334 = vpop.f32.mrf.mxu0
      %v335 = vadd.f32 %v259, %v334
      %336 = vmatmul.bf16.gmra.mxu0 %v293
      %v337 = vpop.f32.mrf.mxu0
      %v338 = vadd.f32 %v259, %v337
      %v339 = vpop.f32.mrf.mxu0
      %v340 = vadd.f32 %v259, %v339
      %341 = vmatmul.bf16.gmra.mxu0 %v296
      %v342 = vpop.f32.mrf.mxu0
      %v343 = vadd.f32 %v259, %v342
      %v344 = vpop.f32.mrf.mxu0
      %v345 = vadd.f32 %v259, %v344
      %346 = vdwg.mxu0
      %v347 = vmax.f32 %v308, 0.0
      %v348 = vmax.f32 %v310, 0.0
      %v349 = vmax.f32 %v313, 0.0
      %v350 = vmax.f32 %v315, 0.0
      %v351 = vmax.f32 %v318, 0.0
      %v352 = vmax.f32 %v320, 0.0
      %v353 = vmax.f32 %v323, 0.0
      %v354 = vmax.f32 %v325, 0.0
      %v355 = vmax.f32 %v328, 0.0
      %v356 = vmax.f32 %v330, 0.0
      %v357 = vmax.f32 %v333, 0.0
      %v358 = vmax.f32 %v335, 0.0
      %v359 = vmax.f32 %v338, 0.0
      %v360 = vmax.f32 %v340, 0.0
      %v361 = vmax.f32 %v343, 0.0
      %v362 = vmax.f32 %v345, 0.0
      %v363 = vpack.c.bf16 %v348, %v347
      %v364 = vpack.c.bf16 %v350, %v349
      %v365 = vpack.c.bf16 %v352, %v351
      %v366 = vpack.c.bf16 %v354, %v353
      %v367 = vpack.c.bf16 %v356, %v355
      %v368 = vpack.c.bf16 %v358, %v357
      %v369 = vpack.c.bf16 %v360, %v359
      %v370 = vpack.c.bf16 %v362, %v361
      %v371 = vld [vmem:[%s3] sm:$0xf]
      %v372 = vld [vmem:[%s3 + $0x4] sm:$0xf]
      %v373 = vld [vmem:[%s3 + $0x8] sm:$0xf]
      %v374 = vld [vmem:[%s3 + $0xc] sm:$0xf]
      %v375 = vld [vmem:[%s3 + $0x10] sm:$0xf]
      %v376 = vld [vmem:[%s3 + $0x14] sm:$0xf]
      %v377 = vld [vmem:[%s3 + $0x18] sm:$0xf]
      %v378 = vld [vmem:[%s3 + $0x1c] sm:$0xf]
      %v379 = vld [vmem:[%s3 + $0x20] sm:$0xf]
      %v380 = vld [vmem:[%s3 + $0x24] sm:$0xf]
      %v381 = vld [vmem:[%s3 + $0x28] sm:$0xf]
      %v382 = vld [vmem:[%s3 + $0x2c] sm:$0xf]
      %v383 = vld [vmem:[%s3 + $0x30] sm:$0xf]
      %v384 = vld [vmem:[%s3 + $0x34] sm:$0xf]
      %v385 = vld [vmem:[%s3 + $0x38] sm:$0xf]
      %v386 = vld [vmem:[%s3 + $0x3c] sm:$0xf]
      %v387 = vld [vmem:[%s4] sm:$0x1]
      %v389 = vperm.slane %v387, 0
      %v407 = vunpack.c.l.b16 %v371
      %v408 = vunpack.c.l.b16 %v372
      %v409 = vunpack.c.l.b16 %v373
      %v410 = vunpack.c.l.b16 %v374
      %v411 = vunpack.c.l.b16 %v375
      %v412 = vunpack.c.l.b16 %v376
      %v413 = vunpack.c.l.b16 %v377
      %v414 = vunpack.c.l.b16 %v378
      %v415 = vunpack.c.l.b16 %v379
      %v416 = vunpack.c.l.b16 %v380
      %v417 = vunpack.c.l.b16 %v381
      %v418 = vunpack.c.l.b16 %v382
      %v419 = vunpack.c.l.b16 %v383
      %v420 = vunpack.c.l.b16 %v384
      %v421 = vunpack.c.l.b16 %v385
      %v422 = vunpack.c.l.b16 %v386
      %v423 = vpack.c.b16 %v408, %v407
      %v424 = vpack.c.b16 %v410, %v409
      %v425 = vpack.c.b16 %v412, %v411
      %v426 = vpack.c.b16 %v414, %v413
      %v427 = vpack.c.b16 %v416, %v415
      %v428 = vpack.c.b16 %v418, %v417
      %v429 = vpack.c.b16 %v420, %v419
      %v430 = vpack.c.b16 %v422, %v421
      %439 = vmatpush.bf16.msra.mxu0 %v430
      %440 = vmatpush.bf16.msra.mxu0 %v429
      %441 = vmatpush.bf16.msra.mxu0 %v428
      %442 = vmatpush.bf16.msra.mxu0 %v427
      %443 = vmatpush.bf16.msra.mxu0 %v426
      %444 = vmatpush.bf16.msra.mxu0 %v425
      %445 = vmatpush.bf16.msra.mxu0 %v424
      %446 = vmatpush.bf16.msra.mxu0 %v423
      %447 = vmatmul.bf16.gmra.mxu0 %v363
      %v448 = vpop.f32.mrf.mxu0
      %v449 = vadd.f32 %v389, %v448
      %v450 = vpop.f32.mrf.mxu0
      %v451 = vadd.f32 %v389, %v450
      %452 = vmatmul.bf16.gmra.mxu0 %v364
      %v453 = vpop.f32.mrf.mxu0
      %v454 = vadd.f32 %v389, %v453
      %v455 = vpop.f32.mrf.mxu0
      %v456 = vadd.f32 %v389, %v455
      %457 = vmatmul.bf16.gmra.mxu0 %v365
      %v458 = vpop.f32.mrf.mxu0
      %v459 = vadd.f32 %v389, %v458
      %v460 = vpop.f32.mrf.mxu0
      %v461 = vadd.f32 %v389, %v460
      %462 = vmatmul.bf16.gmra.mxu0 %v366
      %v463 = vpop.f32.mrf.mxu0
      %v464 = vadd.f32 %v389, %v463
      %v465 = vpop.f32.mrf.mxu0
      %v466 = vadd.f32 %v389, %v465
      %467 = vmatmul.bf16.gmra.mxu0 %v367
      %v468 = vpop.f32.mrf.mxu0
      %v469 = vadd.f32 %v389, %v468
      %v470 = vpop.f32.mrf.mxu0
      %v471 = vadd.f32 %v389, %v470
      %472 = vmatmul.bf16.gmra.mxu0 %v368
      %v473 = vpop.f32.mrf.mxu0
      %v474 = vadd.f32 %v389, %v473
      %v475 = vpop.f32.mrf.mxu0
      %v476 = vadd.f32 %v389, %v475
      %477 = vmatmul.bf16.gmra.mxu0 %v369
      %v478 = vpop.f32.mrf.mxu0
      %v479 = vadd.f32 %v389, %v478
      %v480 = vpop.f32.mrf.mxu0
      %v481 = vadd.f32 %v389, %v480
      %482 = vmatmul.bf16.gmra.mxu0 %v370
      %v483 = vpop.f32.mrf.mxu0
      %v484 = vadd.f32 %v389, %v483
      %v485 = vpop.f32.mrf.mxu0
      %v486 = vadd.f32 %v389, %v485
      %487 = vdwg.mxu0
      %488 = vst.msk [vmem:[%s226] sm:$0xff] %vm273, %v449
      %489 = vst.msk [vmem:[%s226 + $0x8] sm:$0xff] %vm273, %v451
      %490 = vst.msk [vmem:[%s226 + $0x10] sm:$0xff] %vm273, %v454
      %491 = vst.msk [vmem:[%s226 + $0x18] sm:$0xff] %vm273, %v456
      %492 = vst.msk [vmem:[%s226 + $0x20] sm:$0xff] %vm273, %v459
      %493 = vst.msk [vmem:[%s226 + $0x28] sm:$0xff] %vm273, %v461
      %494 = vst.msk [vmem:[%s226 + $0x30] sm:$0xff] %vm273, %v464
      %495 = vst.msk [vmem:[%s226 + $0x38] sm:$0xff] %vm273, %v466
      %496 = vst.msk [vmem:[%s226 + $0x40] sm:$0xff] %vm273, %v469
      %497 = vst.msk [vmem:[%s226 + $0x48] sm:$0xff] %vm273, %v471
      %498 = vst.msk [vmem:[%s226 + $0x50] sm:$0xff] %vm273, %v474
      %499 = vst.msk [vmem:[%s226 + $0x58] sm:$0xff] %vm273, %v476
      %500 = vst.msk [vmem:[%s226 + $0x60] sm:$0xff] %vm273, %v479
      %501 = vst.msk [vmem:[%s226 + $0x68] sm:$0xff] %vm273, %v481
      %502 = vst.msk [vmem:[%s226 + $0x70] sm:$0xff] %vm273, %v484
      %503 = vst.msk [vmem:[%s226 + $0x78] sm:$0xff] %vm273, %v486
      %s504 = smul.u32 16, %s16
      %p505 = scmp.lt.s32.totalorder %s504, 31
      %s506 = scalar_select %p505, %s504, 31
      %s507 = smul.addr %s506, 8
      %s508 = scalar_lea.vmem %s5, %s507
      // Predicated region
      $region41: #{_lambda_.1} parent=39 // pred_check
        %p509 = pneg %p144
      $region42: #{_lambda_.1} parent=39 // pred_check_branch
        %511 = sbr.rel (%p509) target = $region44
      $region43: #{_lambda_.1} parent=39 // pred_region
        %s512 = smul.u32 16, %s16
      $region44: #{_lambda_.1} parent=39 // pred_fallthru
        _
    $region40: #{_lambda_.1} parent=5 // pred_fallthru
      _
    %p513 = scmp.le.s32.totalorder 2, %s11
    // Predicated region
    $region45: #{_lambda_.1} parent=5 // pred_check
      %p514 = pneg %p513
    $region46: #{_lambda_.1} parent=5 // pred_check_branch
      %516 = sbr.rel (%p514) target = $region48
    $region47: #{_lambda_.1} parent=5 // pred_region
      %s517 = ssub.s32 %s11, 2
      // Predicated region
      $region49: #{_lambda_.1} parent=47 // pred_check
        %p518 = pneg %p150
      $region50: #{_lambda_.1} parent=47 // pred_check_branch
        %520 = sbr.rel (%p518) target = $region52
      $region51: #{_lambda_.1} parent=47 // pred_region
        %s521 = smul.u32 16, %s17
        %p522 = scmp.lt.s32.totalorder %s521, 31
        %s523 = scalar_select %p522, %s521, 31
        %s524 = smul.addr %s523, 8
        %s525 = scalar_lea.vmem %s5, %s524
      $region52: #{_lambda_.1} parent=47 // pred_fallthru
        _
    $region48: #{_lambda_.1} parent=5 // pred_fallthru
      _
  $region6: #{_lambda_.1} parent=0 // loop_footer
    %s15 = sadd.s32 1, %s11
  $region7: #{_lambda_.1} parent=0 // loop_footer_branch
    %10 = sbr.rel target = $region3
  $region8: #{_lambda_.1} parent=0 // loop_exit
    _

</llo_original>
